<compile_context>
chip_gen: v7x
topology: tpu7x:2x2x1
jax: 0.10.0
libtpu: 0.0.40
codegen_flags: <defaults>
</compile_context>

<pallas_src>
import functools

import numpy as np
import jax
import jax.numpy as jnp
from jax.experimental import pallas as pl
from jax.experimental.pallas import tpu as pltpu


# --------------------------------------------------------------------------
# Kernels
# --------------------------------------------------------------------------
def _band_kernel(x_ref, w1_ref, w2_ref, tbl_ref, out_ref, pad_ref, *, BT, H, WC):
    """Lane-merged path (C < 128).
       x_ref/out_ref: (BT, H, WC) f32;  w*_ref: (3, WC, WC) bf16 band weights;
       tbl_ref: (3, WC) f32 rows [a1, b1, b2_eff];  pad_ref: (BT, H+2, WC) bf16.
    """
    M = BT * H

    # Row halo (height padding) is zeroed once; the interior is fully
    # rewritten every step and never touches rows 0 / H+1.  The grid axis is
    # "arbitrary" => sequential on one core, so the zeros persist in scratch.
    @pl.when(pl.program_id(0) == 0)
    def _zero_halo():
        zrow = jnp.zeros((BT, 1, WC), jnp.bfloat16)
        pad_ref[:, 0:1, :] = zrow
        pad_ref[:, H + 1:H + 2, :] = zrow

    def conv(w_ref):
        # 3 row-shifted (M, WC) x (WC, WC) bf16 matmuls; the kx taps and the
        # width zero-padding live inside the band weights.  f32 accumulation,
        # accumulator initialised from the first dot.
        acc = jnp.dot(pad_ref[:, 0:H, :].reshape(M, WC), w_ref[0],
                      preferred_element_type=jnp.float32)
        for ky in (1, 2):
            acc = acc + jnp.dot(pad_ref[:, ky:ky + H, :].reshape(M, WC),
                                w_ref[ky], preferred_element_type=jnp.float32)
        return acc

    x = x_ref[...]                                       # (BT, H, WC) f32
    pad_ref[:, 1:H + 1, :] = x.astype(jnp.bfloat16)      # conv1 input (one cast)

    # conv1 -> bn1 (alpha1 folded into a1) -> relu
    h = jnp.maximum(conv(w1_ref) * tbl_ref[0:1, :] + tbl_ref[1:2, :], 0.0)

    # conv2 (bn2 * lambda * fusion gate folded into weights / bias)
    pad_ref[:, 1:H + 1, :] = h.reshape(BT, H, WC).astype(jnp.bfloat16)
    y = conv(w2_ref) + tbl_ref[2:3, :]

    # residual add + relu, single lane-dense full-width store
    out_ref[...] = jnp.maximum(y.reshape(BT, H, WC) + x, 0.0)


def _nhwc_kernel(x_ref, w1_ref, w2_ref, tbl_ref, out_ref, pad_ref, *, BT, H, W, C):
    """General path (used when C is large).
       x_ref/out_ref: (BT, H, W, C) f32;  w*_ref: (3, 3*C, C) bf16 (kx folded
       into the K dim);  tbl_ref: (3, C) f32;  pad_ref: (BT, H+2, W+2, C) bf16.
    """
    # TODO(synk): for Cg >= 128 the block-diagonal (grouped) structure could be
    # exploited with per-group (M, 3*Cg) x (3*Cg, Cg) matmuls.
    M = BT * H * W

    @pl.when(pl.program_id(0) == 0)
    def _zero_halo():
        pad_ref[:, 0:1, :, :] = jnp.zeros((BT, 1, W + 2, C), jnp.bfloat16)
        pad_ref[:, H + 1:H + 2, :, :] = jnp.zeros((BT, 1, W + 2, C), jnp.bfloat16)
        pad_ref[:, :, 0:1, :] = jnp.zeros((BT, H + 2, 1, C), jnp.bfloat16)
        pad_ref[:, :, W + 1:W + 2, :] = jnp.zeros((BT, H + 2, 1, C), jnp.bfloat16)

    def conv(w_ref):
        acc = None
        for ky in range(3):
            patch = jnp.concatenate(
                [pad_ref[:, ky:ky + H, kx:kx + W, :] for kx in range(3)],
                axis=-1).reshape(M, 3 * C)
            d = jnp.dot(patch, w_ref[ky], preferred_element_type=jnp.float32)
            acc = d if acc is None else acc + d
        return acc

    x = x_ref[...]
    pad_ref[:, 1:H + 1, 1:W + 1, :] = x.astype(jnp.bfloat16)
    h = jnp.maximum(conv(w1_ref) * tbl_ref[0:1, :] + tbl_ref[1:2, :], 0.0)
    pad_ref[:, 1:H + 1, 1:W + 1, :] = h.reshape(BT, H, W, C).astype(jnp.bfloat16)
    y = conv(w2_ref) + tbl_ref[2:3, :]
    out_ref[...] = jnp.maximum(y.reshape(BT, H, W, C) + x, 0.0)


# --------------------------------------------------------------------------
# Parameter preparation (plain JAX, host side)
# --------------------------------------------------------------------------
def _block_diag_weight(w_sign, parallel):
    """(Cout, Cin_g, 3, 3) grouped OIHW -> (3, 3, Cin, Cout) dense block-diag."""
    Cout, Cin_g, _, _ = w_sign.shape
    Cout_g = Cout // parallel
    Cin = Cin_g * parallel
    wf = jnp.zeros((3, 3, Cin, Cout), jnp.float32)
    for g in range(parallel):
        blk = jnp.transpose(w_sign[g * Cout_g:(g + 1) * Cout_g], (2, 3, 1, 0))
        wf = wf.at[:, :, g * Cin_g:(g + 1) * Cin_g,
                   g * Cout_g:(g + 1) * Cout_g].set(blk)
    return wf


def _gate_matrix(C_s, parallel, Cg):
    """(C, C) linear map of the fusion gate, reproducing the reference's
    stale-idx bug (every output group gates the LAST group's slice)."""
    eye = jnp.eye(Cg, dtype=jnp.float32)
    gate = jnp.clip(jnp.asarray(C_s, jnp.float32).reshape(parallel), 0.0, 1.0)
    cols = []
    for gp in range(parallel):
        col = jnp.tile((1.0 - gate[gp]) * eye[None], (parallel, 1, 1))
        col = col.at[parallel - 1].add(gate[gp] * eye)
        cols.append(col.reshape(parallel * Cg, Cg))
    return jnp.concatenate(cols, axis=1)


def _band_weight(wf, W):
    """(3, 3, Ci, Co) -> (3, W*Ci, W*Co): fold the kx taps and width
    zero-padding of a 3x3 'same' conv into banded (Toeplitz) matrices."""
    _, _, Ci, Co = wf.shape
    ind = np.zeros((3, W, W), np.float32)
    for kx in range(3):
        for wo in range(W):
            wi = wo + kx - 1
            if 0 <= wi < W:
                ind[kx, wi, wo] = 1.0
    band = jnp.einsum('xab,kxio->kaibo', jnp.asarray(ind), wf)
    return band.reshape(3, W * Ci, W * Co)


def _prepare(params, *, parallel, multiplication, eps=1e-5):
    w1, w2 = params['w1'], params['w2']
    C = w1.shape[0]
    Cg = C // parallel

    alpha1 = jnp.mean(jnp.abs(w1), axis=(1, 2, 3))
    alpha2 = jnp.mean(jnp.abs(w2), axis=(1, 2, 3))
    wf1 = _block_diag_weight(jnp.sign(w1), parallel)      # (3,3,Cin,C), +/-1
    wf2 = _block_diag_weight(jnp.sign(w2), parallel)      # (3,3,C,C),   +/-1

    a1_bn = params['bn1_gamma'] / jnp.sqrt(params['bn1_var'] + eps)
    b1_bn = params['bn1_beta'] - params['bn1_mean'] * a1_bn
    a2_bn = params['bn2_gamma'] / jnp.sqrt(params['bn2_var'] + eps)
    b2_bn = params['bn2_beta'] - params['bn2_mean'] * a2_bn

    lam = (jnp.repeat(jnp.asarray(params['lambdas'], jnp.float32), Cg)
           if multiplication else jnp.ones((C,), jnp.float32))
    gate_m = (_gate_matrix(params['C_s'], parallel, Cg) if parallel > 1
              else jnp.eye(C, dtype=jnp.float32))

    # conv1: keep +/-1 weights (exact in bf16); alpha1*bn1 scale applied in-kernel.
    a1 = (alpha1 * a1_bn).astype(jnp.float32)
    b1 = b1_bn.astype(jnp.float32)
    # conv2: bn2 scale, lambda and the (linear) fusion gate folded into the
    # weights; the BN bias goes through the gate too.
    scale2 = alpha2 * lam * a2_bn
    wf2_eff = jnp.einsum('kxio,o,op->kxip', wf2, scale2, gate_m)
    b2 = ((b2_bn * lam) @ gate_m).astype(jnp.float32)
    return wf1, wf2_eff, a1, b1, b2, C


# --------------------------------------------------------------------------
# Chip-aware sizing
# --------------------------------------------------------------------------
def _vmem_capacity_bytes():
    try:
        cap = getattr(pltpu.get_tpu_info(), 'vmem_capacity_bytes', None)
        if cap:
            return int(cap)
    except Exception:
        pass
    return 64 * 1024 * 1024            # conservative (v7x per-core VMEM)


def _pick_bt(B, per_img, fixed, budget):
    for bt in range(B, 0, -1):
        if B % bt == 0 and fixed + bt * per_img <= budget:
            return bt
    return 1


# --------------------------------------------------------------------------
# Wrapper
# --------------------------------------------------------------------------
def parallel_binary_block_forward(x_nchw, params, *, parallel, multiplication,
                                  force_path=None):
    B, Cin, H, W = x_nchw.shape
    wf1, wf2, a1, b1, b2, C = _prepare(params, parallel=parallel,
                                       multiplication=multiplication)
    assert Cin == C, "residual path requires inplanes == planes, no downsample"

    x_nhwc = jnp.transpose(x_nchw, (0, 2, 3, 1)).astype(jnp.float32)
    cap = _vmem_capacity_bytes()

    use_band = (C < 128) and (W * C <= 512)
    if force_path == 'band':
        use_band = True
    elif force_path == 'nhwc':
        use_band = False

    if use_band:
        WC = W * C
        w1k = _band_weight(wf1, W).astype(jnp.bfloat16)    # exact +/-1 / 0
        w2k = _band_weight(wf2, W).astype(jnp.bfloat16)    # folded bn2/lam/gate
        tbl = jnp.stack([jnp.tile(a1, W), jnp.tile(b1, W), jnp.tile(b2, W)])
        # weights + tbl are double-buffered by the pipeline; account for them.
        fixed = 2 * 2 * 3 * WC * WC * 2 + 2 * 3 * WC * 4
        per_img = 32 * H * WC + 2 * (H + 2) * WC           # blocks+temps+scratch
        BT = _pick_bt(B, per_img, fixed, int(cap * 0.55))
        vmem_limit = int(min(cap * 0.9,
                             max(fixed + BT * per_img + (8 << 20), 32 << 20)))
        kernel = functools.partial(_band_kernel, BT=BT, H=H, WC=WC)
        out = pl.pallas_call(
            kernel,
            out_shape=jax.ShapeDtypeStruct((B, H, WC), jnp.float32),
            grid=(B // BT,),
            in_specs=[
                pl.BlockSpec((BT, H, WC), lambda b: (b, 0, 0)),   # x (lane dense)
                pl.BlockSpec((3, WC, WC), lambda b: (0, 0, 0)),   # w1 band
                pl.BlockSpec((3, WC, WC), lambda b: (0, 0, 0)),   # w2 band (folded)
                pl.BlockSpec((3, WC), lambda b: (0, 0)),          # a1, b1, b2
            ],
            out_specs=pl.BlockSpec((BT, H, WC), lambda b: (b, 0, 0)),
            scratch_shapes=[pltpu.VMEM((BT, H + 2, WC), jnp.bfloat16)],
            compiler_params=pltpu.CompilerParams(
                dimension_semantics=("arbitrary",),
                vmem_limit_bytes=vmem_limit),
        )(x_nhwc.reshape(B, H, WC), w1k, w2k, tbl)
        out_nhwc = out.reshape(B, H, W, C)
    else:
        w1k = wf1.reshape(3, 3 * C, C).astype(jnp.bfloat16)
        w2k = wf2.reshape(3, 3 * C, C).astype(jnp.bfloat16)
        tbl = jnp.stack([a1, b1, b2])
        fixed = 2 * 2 * 9 * C * C * 2 + 2 * 3 * C * 4
        per_img = 40 * H * W * C + 2 * (H + 2) * (W + 2) * C
        BT = _pick_bt(B, per_img, fixed, int(cap * 0.55))
        vmem_limit = int(min(cap * 0.9,
                             max(fixed + BT * per_img + (8 << 20), 32 << 20)))
        kernel = functools.partial(_nhwc_kernel, BT=BT, H=H, W=W, C=C)
        out_nhwc = pl.pallas_call(
            kernel,
            out_shape=jax.ShapeDtypeStruct((B, H, W, C), jnp.float32),
            grid=(B // BT,),
            in_specs=[
                pl.BlockSpec((BT, H, W, C), lambda b: (b, 0, 0, 0)),
                pl.BlockSpec((3, 3 * C, C), lambda b: (0, 0, 0)),
                pl.BlockSpec((3, 3 * C, C), lambda b: (0, 0, 0)),
                pl.BlockSpec((3, C), lambda b: (0, 0)),
            ],
            out_specs=pl.BlockSpec((BT, H, W, C), lambda b: (b, 0, 0, 0)),
            scratch_shapes=[pltpu.VMEM((BT, H + 2, W + 2, C), jnp.bfloat16)],
            compiler_params=pltpu.CompilerParams(
                dimension_semantics=("arbitrary",),
                vmem_limit_bytes=vmem_limit),
        )(x_nhwc, w1k, w2k, tbl)

    return jnp.transpose(out_nhwc, (0, 3, 1, 2))           # back to NCHW


# --------------------------------------------------------------------------
# Pure-JAX reference (mirrors the PyTorch forward, incl. the stale-idx bug).
# Conv activations are cast to bf16 to match the kernel's MXU path; all
# scales / BN / gate are applied in f32.
# --------------------------------------------------------------------------
def reference_forward(x, params, *, parallel, multiplication):
    def bconv(inp, w):
        alpha = jnp.mean(jnp.abs(w), axis=(1, 2, 3))
        y = jax.lax.conv_general_dilated(
            inp.astype(jnp.bfloat16), jnp.sign(w).astype(jnp.bfloat16),
            window_strides=(1, 1), padding=((1, 1), (1, 1)),
            dimension_numbers=('NCHW', 'OIHW', 'NCHW'),
            feature_group_count=parallel,
            preferred_element_type=jnp.float32)
        return y * alpha[None, :, None, None]

    def bn(y, g, bta, m, v, eps=1e-5):
        a = g / jnp.sqrt(v + eps)
        b = bta - m * a
        return y * a[None, :, None, None] + b[None, :, None, None]

    out = jax.nn.relu(bn(bconv(x, params['w1']), params['bn1_gamma'],
                         params['bn1_beta'], params['bn1_mean'],
                         params['bn1_var']))
    out = bn(bconv(out, params['w2']), params['bn2_gamma'], params['bn2_beta'],
             params['bn2_mean'], params['bn2_var'])
    B, C, H, W = out.shape
    Cg = C // parallel
    if multiplication:
        out = jnp.concatenate(
            [out[:, g * Cg:(g + 1) * Cg] * params['lambdas'][g]
             for g in range(parallel)], axis=1)
    if parallel > 1:
        sq = out.reshape(B, parallel, Cg, H, W).sum(axis=1)
        last = out[:, (parallel - 1) * Cg:parallel * Cg]    # stale-idx bug
        pieces = []
        for g in range(parallel):
            c = jnp.clip(params['C_s'][g], 0.0, 1.0)
            pieces.append(last * c + sq * (1.0 - c))
        out = jnp.concatenate(pieces, axis=1)
    return jax.nn.relu(out + x)


# --------------------------------------------------------------------------
if __name__ == "__main__":
    B, inplanes, planes, parallel, H, W = 2, 4, 4, 2, 16, 16
    multiplication = True                      # required for parallel>1 path
    Ctot = planes * parallel                   # total channels = 8
    Cin_g1 = (inplanes * parallel) // parallel
    Cin_g2 = Ctot // parallel

    key = jax.random.PRNGKey(0)
    ks = jax.random.split(key, 13)
    params = {
        'w1': 0.5 * jax.random.normal(ks[0], (Ctot, Cin_g1, 3, 3), jnp.float32),
        'w2': 0.5 * jax.random.normal(ks[1], (Ctot, Cin_g2, 3, 3), jnp.float32),
        'bn1_gamma': 0.5 + jax.random.uniform(ks[2], (Ctot,), jnp.float32),
        'bn1_beta': 0.1 * jax.random.normal(ks[3], (Ctot,), jnp.float32),
        'bn1_mean': 0.1 * jax.random.normal(ks[4], (Ctot,), jnp.float32),
        'bn1_var': 0.5 + jax.random.uniform(ks[5], (Ctot,), jnp.float32),
        'bn2_gamma': 0.5 + jax.random.uniform(ks[6], (Ctot,), jnp.float32),
        'bn2_beta': 0.1 * jax.random.normal(ks[7], (Ctot,), jnp.float32),
        'bn2_mean': 0.1 * jax.random.normal(ks[8], (Ctot,), jnp.float32),
        'bn2_var': 0.5 + jax.random.uniform(ks[9], (Ctot,), jnp.float32),
        'lambdas': 0.5 + jax.random.uniform(ks[10], (parallel,), jnp.float32),
        'C_s': jax.random.uniform(ks[11], (parallel,), jnp.float32),
    }
    x = jax.random.normal(ks[12], (B, Ctot, H, W), jnp.float32)

    ref = reference_forward(x, params, parallel=parallel,
                            multiplication=multiplication)

    # Lane-merged band path (the fast path for C < 128).
    out = parallel_binary_block_forward(x, params, parallel=parallel,
                                        multiplication=multiplication)
    out = jax.block_until_ready(out)
    assert out.shape == (B, Ctot, H, W)
    err = float(jnp.max(jnp.abs(out - ref)))
    assert jnp.allclose(out, ref, rtol=5e-2, atol=5e-2), f"band max err {err}"

    # General NHWC path (for C >= 128); exercised here at small C for coverage.
    out2 = parallel_binary_block_forward(x, params, parallel=parallel,
                                         multiplication=multiplication,
                                         force_path='nhwc')
    out2 = jax.block_until_ready(out2)
    err2 = float(jnp.max(jnp.abs(out2 - ref)))
    assert jnp.allclose(out2, ref, rtol=5e-2, atol=5e-2), f"nhwc max err {err2}"

    print("KERNEL_OK")
</pallas_src>

<mosaic_0001>
module attributes {stable_mosaic.version = 11 : i64} {
  func.func @_band_kernel(%arg0: i32, %arg1: memref<2x16x128xf32, #tpu.memory_space<vmem>>, %arg2: memref<3x128x128xbf16, #tpu.memory_space<vmem>>, %arg3: memref<3x128x128xbf16, #tpu.memory_space<vmem>>, %arg4: memref<3x128xf32, #tpu.memory_space<vmem>>, %arg5: memref<2x16x128xf32, #tpu.memory_space<vmem>>, %arg6: memref<2x18x128xbf16, #tpu.memory_space<vmem>>) attributes {dimension_semantics = [#tpu.dimension_semantics<arbitrary>], iteration_bounds = array<i64: 1>, scalar_prefetch = 0 : i64, scratch_operands = 1 : i64, tpu.core_type = #tpu.core_type<tc>, window_params = [{transform_indices = @transform_0, window_bounds = array<i64: 2, 16, 128>}, {pipeline_mode = #tpu.pipeline_mode<synchronous>, transform_indices = @transform_1, window_bounds = array<i64: 3, 128, 128>}, {pipeline_mode = #tpu.pipeline_mode<synchronous>, transform_indices = @transform_2, window_bounds = array<i64: 3, 128, 128>}, {pipeline_mode = #tpu.pipeline_mode<synchronous>, transform_indices = @transform_3, window_bounds = array<i64: 3, 128>}, {transform_indices = @transform_4, window_bounds = array<i64: 2, 16, 128>}]} {
    %c0_i32 = arith.constant 0 : i32
    %0 = arith.cmpi eq, %arg0, %c0_i32 : i32
    %1 = arith.extui %0 : i1 to i32
    %c0_i32_0 = arith.constant 0 : i32
    %2 = arith.cmpi ne, %1, %c0_i32_0 : i32
    scf.if %2 {
      %cst_59 = arith.constant 0.000000e+00 : bf16
      %59 = vector.broadcast %cst_59 : bf16 to vector<2x1x128xbf16>
      %c0_60 = arith.constant 0 : index
      %c0_61 = arith.constant 0 : index
      %c0_62 = arith.constant 0 : index
      %60 = vector.load %arg6[%c0_60, %c0_61, %c0_62] : memref<2x18x128xbf16, #tpu.memory_space<vmem>>, vector<2x1x128xbf16>
      tpu.vector_store %arg6[%c0_60, %c0_61, %c0_62], %59 {strides = array<i32>} : memref<2x18x128xbf16, #tpu.memory_space<vmem>>, vector<2x1x128xbf16>,
      %c0_63 = arith.constant 0 : index
      %c17 = arith.constant 17 : index
      %c0_64 = arith.constant 0 : index
      %61 = vector.load %arg6[%c0_63, %c17, %c0_64] : memref<2x18x128xbf16, #tpu.memory_space<vmem>>, vector<2x1x128xbf16>
      tpu.vector_store %arg6[%c0_63, %c17, %c0_64], %59 {strides = array<i32>} : memref<2x18x128xbf16, #tpu.memory_space<vmem>>, vector<2x1x128xbf16>,
    } else {
    }
    %c0 = arith.constant 0 : index
    %c0_1 = arith.constant 0 : index
    %c0_2 = arith.constant 0 : index
    %3 = vector.load %arg1[%c0, %c0_1, %c0_2] : memref<2x16x128xf32, #tpu.memory_space<vmem>>, vector<2x16x128xf32>
    %4 = arith.truncf %3 : vector<2x16x128xf32> to vector<2x16x128xbf16>
    %c0_3 = arith.constant 0 : index
    %c1 = arith.constant 1 : index
    %c0_4 = arith.constant 0 : index
    %5 = vector.load %arg6[%c0_3, %c1, %c0_4] : memref<2x18x128xbf16, #tpu.memory_space<vmem>>, vector<2x16x128xbf16>
    tpu.vector_store %arg6[%c0_3, %c1, %c0_4], %4 {strides = array<i32>} : memref<2x18x128xbf16, #tpu.memory_space<vmem>>, vector<2x16x128xbf16>,
    %c0_5 = arith.constant 0 : index
    %c0_6 = arith.constant 0 : index
    %c0_7 = arith.constant 0 : index
    %6 = vector.load %arg6[%c0_5, %c0_6, %c0_7] : memref<2x18x128xbf16, #tpu.memory_space<vmem>>, vector<2x16x128xbf16>
    %7 = vector.shape_cast %6 : vector<2x16x128xbf16> to vector<32x128xbf16>
    %c0_8 = arith.constant 0 : index
    %c0_9 = arith.constant 0 : index
    %c0_10 = arith.constant 0 : index
    %8 = vector.load %arg2[%c0_8, %c0_9, %c0_10] : memref<3x128x128xbf16, #tpu.memory_space<vmem>>, vector<1x128x128xbf16>
    %9 = vector.shape_cast %8 : vector<1x128x128xbf16> to vector<128x128xbf16>
    %cst = arith.constant dense<0.000000e+00> : vector<32x128xf32>
    %10 = tpu.matmul %7, %9, %cst {dimension_numbers = #tpu.dot_dimension_numbers<[1], [0], [0], [1], [0, 0, 1, 1], [], []>} : vector<32x128xbf16>, vector<128x128xbf16>, vector<32x128xf32> -> vector<32x128xf32>
    %c0_11 = arith.constant 0 : index
    %c1_12 = arith.constant 1 : index
    %c0_13 = arith.constant 0 : index
    %11 = vector.load %arg6[%c0_11, %c1_12, %c0_13] : memref<2x18x128xbf16, #tpu.memory_space<vmem>>, vector<2x16x128xbf16>
    %12 = vector.shape_cast %11 : vector<2x16x128xbf16> to vector<32x128xbf16>
    %c1_14 = arith.constant 1 : index
    %c0_15 = arith.constant 0 : index
    %c0_16 = arith.constant 0 : index
    %13 = vector.load %arg2[%c1_14, %c0_15, %c0_16] : memref<3x128x128xbf16, #tpu.memory_space<vmem>>, vector<1x128x128xbf16>
    %14 = vector.shape_cast %13 : vector<1x128x128xbf16> to vector<128x128xbf16>
    %cst_17 = arith.constant dense<0.000000e+00> : vector<32x128xf32>
    %15 = tpu.matmul %12, %14, %cst_17 {dimension_numbers = #tpu.dot_dimension_numbers<[1], [0], [0], [1], [0, 0, 1, 1], [], []>} : vector<32x128xbf16>, vector<128x128xbf16>, vector<32x128xf32> -> vector<32x128xf32>
    %16 = arith.addf %10, %15 : vector<32x128xf32>
    %c0_18 = arith.constant 0 : index
    %c2 = arith.constant 2 : index
    %c0_19 = arith.constant 0 : index
    %17 = vector.load %arg6[%c0_18, %c2, %c0_19] : memref<2x18x128xbf16, #tpu.memory_space<vmem>>, vector<2x16x128xbf16>
    %18 = vector.shape_cast %17 : vector<2x16x128xbf16> to vector<32x128xbf16>
    %c2_20 = arith.constant 2 : index
    %c0_21 = arith.constant 0 : index
    %c0_22 = arith.constant 0 : index
    %19 = vector.load %arg2[%c2_20, %c0_21, %c0_22] : memref<3x128x128xbf16, #tpu.memory_space<vmem>>, vector<1x128x128xbf16>
    %20 = vector.shape_cast %19 : vector<1x128x128xbf16> to vector<128x128xbf16>
    %cst_23 = arith.constant dense<0.000000e+00> : vector<32x128xf32>
    %21 = tpu.matmul %18, %20, %cst_23 {dimension_numbers = #tpu.dot_dimension_numbers<[1], [0], [0], [1], [0, 0, 1, 1], [], []>} : vector<32x128xbf16>, vector<128x128xbf16>, vector<32x128xf32> -> vector<32x128xf32>
    %22 = arith.addf %16, %21 : vector<32x128xf32>
    %c0_24 = arith.constant 0 : index
    %c0_25 = arith.constant 0 : index
    %23 = vector.load %arg4[%c0_24, %c0_25] : memref<3x128xf32, #tpu.memory_space<vmem>>, vector<1x128xf32>
    %24 = vector.broadcast %23 : vector<1x128xf32> to vector<32x128xf32>
    %25 = arith.mulf %22, %24 : vector<32x128xf32>
    %c1_26 = arith.constant 1 : index
    %c0_27 = arith.constant 0 : index
    %26 = vector.load %arg4[%c1_26, %c0_27] : memref<3x128xf32, #tpu.memory_space<vmem>>, vector<1x128xf32>
    %27 = vector.broadcast %26 : vector<1x128xf32> to vector<32x128xf32>
    %28 = arith.addf %25, %27 : vector<32x128xf32>
    %cst_28 = arith.constant 0.000000e+00 : f32
    %29 = vector.broadcast %cst_28 : f32 to vector<32x128xf32>
    %30 = arith.maximumf %28, %29 : vector<32x128xf32>
    %31 = vector.shape_cast %30 : vector<32x128xf32> to vector<2x16x128xf32>
    %32 = arith.truncf %31 : vector<2x16x128xf32> to vector<2x16x128xbf16>
    %c0_29 = arith.constant 0 : index
    %c1_30 = arith.constant 1 : index
    %c0_31 = arith.constant 0 : index
    %33 = vector.load %arg6[%c0_29, %c1_30, %c0_31] : memref<2x18x128xbf16, #tpu.memory_space<vmem>>, vector<2x16x128xbf16>
    tpu.vector_store %arg6[%c0_29, %c1_30, %c0_31], %32 {strides = array<i32>} : memref<2x18x128xbf16, #tpu.memory_space<vmem>>, vector<2x16x128xbf16>,
    %c0_32 = arith.constant 0 : index
    %c0_33 = arith.constant 0 : index
    %c0_34 = arith.constant 0 : index
    %34 = vector.load %arg6[%c0_32, %c0_33, %c0_34] : memref<2x18x128xbf16, #tpu.memory_space<vmem>>, vector<2x16x128xbf16>
    %35 = vector.shape_cast %34 : vector<2x16x128xbf16> to vector<32x128xbf16>
    %c0_35 = arith.constant 0 : index
    %c0_36 = arith.constant 0 : index
    %c0_37 = arith.constant 0 : index
    %36 = vector.load %arg3[%c0_35, %c0_36, %c0_37] : memref<3x128x128xbf16, #tpu.memory_space<vmem>>, vector<1x128x128xbf16>
    %37 = vector.shape_cast %36 : vector<1x128x128xbf16> to vector<128x128xbf16>
    %cst_38 = arith.constant dense<0.000000e+00> : vector<32x128xf32>
    %38 = tpu.matmul %35, %37, %cst_38 {dimension_numbers = #tpu.dot_dimension_numbers<[1], [0], [0], [1], [0, 0, 1, 1], [], []>} : vector<32x128xbf16>, vector<128x128xbf16>, vector<32x128xf32> -> vector<32x128xf32>
    %c0_39 = arith.constant 0 : index
    %c1_40 = arith.constant 1 : index
    %c0_41 = arith.constant 0 : index
    %39 = vector.load %arg6[%c0_39, %c1_40, %c0_41] : memref<2x18x128xbf16, #tpu.memory_space<vmem>>, vector<2x16x128xbf16>
    %40 = vector.shape_cast %39 : vector<2x16x128xbf16> to vector<32x128xbf16>
    %c1_42 = arith.constant 1 : index
    %c0_43 = arith.constant 0 : index
    %c0_44 = arith.constant 0 : index
    %41 = vector.load %arg3[%c1_42, %c0_43, %c0_44] : memref<3x128x128xbf16, #tpu.memory_space<vmem>>, vector<1x128x128xbf16>
    %42 = vector.shape_cast %41 : vector<1x128x128xbf16> to vector<128x128xbf16>
    %cst_45 = arith.constant dense<0.000000e+00> : vector<32x128xf32>
    %43 = tpu.matmul %40, %42, %cst_45 {dimension_numbers = #tpu.dot_dimension_numbers<[1], [0], [0], [1], [0, 0, 1, 1], [], []>} : vector<32x128xbf16>, vector<128x128xbf16>, vector<32x128xf32> -> vector<32x128xf32>
    %44 = arith.addf %38, %43 : vector<32x128xf32>
    %c0_46 = arith.constant 0 : index
    %c2_47 = arith.constant 2 : index
    %c0_48 = arith.constant 0 : index
    %45 = vector.load %arg6[%c0_46, %c2_47, %c0_48] : memref<2x18x128xbf16, #tpu.memory_space<vmem>>, vector<2x16x128xbf16>
    %46 = vector.shape_cast %45 : vector<2x16x128xbf16> to vector<32x128xbf16>
    %c2_49 = arith.constant 2 : index
    %c0_50 = arith.constant 0 : index
    %c0_51 = arith.constant 0 : index
    %47 = vector.load %arg3[%c2_49, %c0_50, %c0_51] : memref<3x128x128xbf16, #tpu.memory_space<vmem>>, vector<1x128x128xbf16>
    %48 = vector.shape_cast %47 : vector<1x128x128xbf16> to vector<128x128xbf16>
    %cst_52 = arith.constant dense<0.000000e+00> : vector<32x128xf32>
    %49 = tpu.matmul %46, %48, %cst_52 {dimension_numbers = #tpu.dot_dimension_numbers<[1], [0], [0], [1], [0, 0, 1, 1], [], []>} : vector<32x128xbf16>, vector<128x128xbf16>, vector<32x128xf32> -> vector<32x128xf32>
    %50 = arith.addf %44, %49 : vector<32x128xf32>
    %c2_53 = arith.constant 2 : index
    %c0_54 = arith.constant 0 : index
    %51 = vector.load %arg4[%c2_53, %c0_54] : memref<3x128xf32, #tpu.memory_space<vmem>>, vector<1x128xf32>
    %52 = vector.broadcast %51 : vector<1x128xf32> to vector<32x128xf32>
    %53 = arith.addf %50, %52 : vector<32x128xf32>
    %54 = vector.shape_cast %53 : vector<32x128xf32> to vector<2x16x128xf32>
    %55 = arith.addf %54, %3 : vector<2x16x128xf32>
    %cst_55 = arith.constant 0.000000e+00 : f32
    %56 = vector.broadcast %cst_55 : f32 to vector<2x16x128xf32>
    %57 = arith.maximumf %55, %56 : vector<2x16x128xf32>
    %c0_56 = arith.constant 0 : index
    %c0_57 = arith.constant 0 : index
    %c0_58 = arith.constant 0 : index
    %58 = vector.load %arg5[%c0_56, %c0_57, %c0_58] : memref<2x16x128xf32, #tpu.memory_space<vmem>>, vector<2x16x128xf32>
    tpu.vector_store %arg5[%c0_56, %c0_57, %c0_58], %57 {strides = array<i32>} : memref<2x16x128xf32, #tpu.memory_space<vmem>>, vector<2x16x128xf32>,
    return
  }
  func.func @transform_0(%arg0: i32) -> (i32, i32, i32) {
    %c0_i32 = arith.constant 0 : i32
    %c0_i32_0 = arith.constant 0 : i32
    %c0_i32_1 = arith.constant 0 : i32
    return %arg0, %c0_i32, %c0_i32_0 : i32, i32, i32
  }
  func.func @transform_1(%arg0: i32) -> (i32, i32, i32) {
    %c0_i32 = arith.constant 0 : i32
    %c0_i32_0 = arith.constant 0 : i32
    %c0_i32_1 = arith.constant 0 : i32
    %c0_i32_2 = arith.constant 0 : i32
    return %c0_i32, %c0_i32_0, %c0_i32_1 : i32, i32, i32
  }
  func.func @transform_2(%arg0: i32) -> (i32, i32, i32) {
    %c0_i32 = arith.constant 0 : i32
    %c0_i32_0 = arith.constant 0 : i32
    %c0_i32_1 = arith.constant 0 : i32
    %c0_i32_2 = arith.constant 0 : i32
    return %c0_i32, %c0_i32_0, %c0_i32_1 : i32, i32, i32
  }
  func.func @transform_3(%arg0: i32) -> (i32, i32) {
    %c0_i32 = arith.constant 0 : i32
    %c0_i32_0 = arith.constant 0 : i32
    %c0_i32_1 = arith.constant 0 : i32
    return %c0_i32, %c0_i32_0 : i32, i32
  }
  func.func @transform_4(%arg0: i32) -> (i32, i32, i32) {
    %c0_i32 = arith.constant 0 : i32
    %c0_i32_0 = arith.constant 0 : i32
    %c0_i32_1 = arith.constant 0 : i32
    return %arg0, %c0_i32, %c0_i32_0 : i32, i32, i32
  }
}

</mosaic_0001>

<llo_original>
// kernel: tpu_custom_call.1
$region0: #{tpu_custom_call.1}
  #allocation0 [shape = 'u32[]', space=smem, size = 0x4, offset = 0x4, fixed_abs, tag = 'smem constant byte address 0x4 - core index']
  #allocation1 [shape = 'u32[144,128]{1,0:T(1,128)}', space=vmem, size = 0x12000, scoped, tag = 'internal scratch']
  #allocation2 [shape = 'bf16[2,18,128]{2,1,0:T(8,128)(2,1)}', space=vmem, size = 0x3000, scoped, tag = 'scratch operand']
  %s0 = inlined_call_operand.hbm [shape: f32[2,16,128], index: 0, kind: input, shape index: {}]
  %s1 = inlined_call_operand.hbm [shape: bf16[3,128,128], index: 1, kind: input, shape index: {}]
  %s2 = inlined_call_operand.hbm [shape: bf16[3,128,128], index: 2, kind: input, shape index: {}]
  %s3 = inlined_call_operand.vmem [shape: f32[3,128], index: 3, kind: input, shape index: {}]
  %s4 = inlined_call_operand.hbm [shape: f32[2,16,128], index: 4, kind: output, shape index: {}]
  %s5 = sld [smem:[#allocation0]]
  $region42: #{tpu_custom_call.1} parent=0
    _
  %s7 = ssub.s32 1, %s5
  %s8 = scalar_select 0, %s7, %s5
  $region1: #{tpu_custom_call.1} parent=0
    #allocation3 [shape = 'u8[16384]{0}', space=vmem, size = 0x4000, scoped, tag = 'input window, operand 0, single buffered']
    #allocation4 [shape = 's32[1]{0}', space=sflag, size = 0x4, scoped, tag = 'scoped memory for tpu_custom_call.1']
    #allocation5 [shape = 's32[1]{0}', space=sflag, size = 0x4, scoped, tag = 'scoped memory for tpu_custom_call.1']
    #allocation6 [shape = 'u8[98304]{0}', space=vmem, size = 0x18000, scoped, tag = 'input window, operand 1, single buffered']
    #allocation7 [shape = 's32[1]{0}', space=sflag, size = 0x4, scoped, tag = 'scoped memory for tpu_custom_call.1']
    #allocation8 [shape = 'u8[98304]{0}', space=vmem, size = 0x18000, scoped, tag = 'input window, operand 2, single buffered']
    #allocation9 [shape = 'u8[16384]{0}', space=vmem, size = 0x4000, scoped, tag = 'output window, operand 0, single buffered']
    %9 = vsyncpa [#allocation4], 0
    %10 = vsyncpa [#allocation7], 0
    %11 = vsyncpa [#allocation5], 0
    // Predicated region
    $region2: #{tpu_custom_call.1} parent=1 // pred_check
      _
    $region3: #{tpu_custom_call.1} parent=1 // pred_check_branch
      %13 = sbr.rel (0) target = $region5
    $region4: #{tpu_custom_call.1} parent=1 // pred_region
      %s15 = ssub.s32 512, 512
      %16 = vsyncadd [#allocation4], %s15
      %s17 = sshll.u32 [#allocation3], 4
      %s18 = int_to_ptr.vmem [resolvable:$true] %s17
      %23 = dma.hbm_to_vmem [thread:$0]  %s0, 512, %s18, [#allocation4], 128, 128, 8
    $region5: #{tpu_custom_call.1} parent=1 // pred_fallthru
      _
    // Predicated region
    $region6: #{tpu_custom_call.1} parent=1 // pred_check
      _
    $region7: #{tpu_custom_call.1} parent=1 // pred_check_branch
      %25 = sbr.rel (0) target = $region9
    $region8: #{tpu_custom_call.1} parent=1 // pred_region
      %s27 = ssub.s32 3072, 3072
      %28 = vsyncadd [#allocation7], %s27
      %s29 = sshll.u32 [#allocation6], 4
      %s30 = int_to_ptr.vmem [resolvable:$true] %s29
      %35 = dma.hbm_to_vmem [thread:$0]  %s1, 3072, %s30, [#allocation7], 64, 64, 4
    $region9: #{tpu_custom_call.1} parent=1 // pred_fallthru
      _
    // Predicated region
    $region10: #{tpu_custom_call.1} parent=1 // pred_check
      _
    $region11: #{tpu_custom_call.1} parent=1 // pred_check_branch
      %37 = sbr.rel (0) target = $region13
    $region12: #{tpu_custom_call.1} parent=1 // pred_region
      %s39 = ssub.s32 3072, 3072
      %40 = vsyncadd [#allocation7], %s39
      %s41 = sshll.u32 [#allocation8], 4
      %s42 = int_to_ptr.vmem [resolvable:$true] %s41
      %47 = dma.hbm_to_vmem [thread:$0]  %s2, 3072, %s42, [#allocation7], 64, 64, 4
    $region13: #{tpu_custom_call.1} parent=1 // pred_fallthru
      _
    // Predicated region
    $region14: #{tpu_custom_call.1} parent=1 // pred_check
      _
    $region15: #{tpu_custom_call.1} parent=1 // pred_check_branch
      %49 = sbr.rel (0) target = $region17
    $region16: #{tpu_custom_call.1} parent=1 // pred_region
      _
    $region17: #{tpu_custom_call.1} parent=1 // pred_fallthru
      _
    // Predicated region
    $region18: #{tpu_custom_call.1} parent=1 // pred_check
      _
    $region19: #{tpu_custom_call.1} parent=1 // pred_check_branch
      %51 = sbr.rel (0) target = $region21
    $region20: #{tpu_custom_call.1} parent=1 // pred_region
      %52 = dma.done [#allocation4], 512
    $region21: #{tpu_custom_call.1} parent=1 // pred_fallthru
      _
    // Predicated region
    $region22: #{tpu_custom_call.1} parent=1 // pred_check
      _
    $region23: #{tpu_custom_call.1} parent=1 // pred_check_branch
      %54 = sbr.rel (0) target = $region25
    $region24: #{tpu_custom_call.1} parent=1 // pred_region
      %55 = dma.done [#allocation7], 3072
    $region25: #{tpu_custom_call.1} parent=1 // pred_fallthru
      _
    // Predicated region
    $region26: #{tpu_custom_call.1} parent=1 // pred_check
      _
    $region27: #{tpu_custom_call.1} parent=1 // pred_check_branch
      %57 = sbr.rel (0) target = $region29
    $region28: #{tpu_custom_call.1} parent=1 // pred_region
      %58 = dma.done [#allocation7], 3072
    $region29: #{tpu_custom_call.1} parent=1 // pred_fallthru
      _
    %p60 = scmp.eq.s32.totalorder 0, 0
    // Predicated region
    $region30: #{tpu_custom_call.1} parent=1 // pred_check
      %p61 = pneg %p60
    $region31: #{tpu_custom_call.1} parent=1 // pred_check_branch
      %63 = sbr.rel (%p61) target = $region33
    $region32: #{tpu_custom_call.1} parent=1 // pred_region
      %vm64 = vcmask 1040384
      %vm65 = vsmask.f32 256
      %vm66 = vmand %vm64, %vm65
      %v67 = vld [vmem:[#allocation2] sm:$0x1]
      %v68 = vsel %vm66, 0, %v67
      %69 = vst [vmem:[#allocation2] sm:$0x1] %v68
      %v70 = vld [vmem:[#allocation2 + $0xc] sm:$0x1]
      %v71 = vsel %vm66, 0, %v70
      %72 = vst [vmem:[#allocation2 + $0xc] sm:$0x1] %v71
      %vm73 = vsmask.f32 7938
      %vm74 = vmand %vm64, %vm73
      %v75 = vld [vmem:[#allocation2 + $0x8] sm:$0x1]
      %v76 = vsel %vm74, 0, %v75
      %77 = vst [vmem:[#allocation2 + $0x8] sm:$0x1] %v76
      %v78 = vld [vmem:[#allocation2 + $0x14] sm:$0x1]
      %v79 = vsel %vm74, 0, %v78
      %80 = vst [vmem:[#allocation2 + $0x14] sm:$0x1] %v79
    $region33: #{tpu_custom_call.1} parent=1 // pred_fallthru
      _
    %v81 = vld [vmem:[#allocation3] sm:$0xff]
    %v82 = vld [vmem:[#allocation3 + $0x8] sm:$0xff]
    %v83 = vld [vmem:[#allocation3 + $0x10] sm:$0xff]
    %v84 = vld [vmem:[#allocation3 + $0x18] sm:$0xff]
    %v85 = vpack.c.bf16 %v82, %v81
    %v86 = vpack.c.bf16 %v84, %v83
    %v89 = vunpack.c.l.b16 %v85
    %v90 = vunpack.c.h.b16 %v85
    %v91 = vunpack.c.l.b16 %v86
    %v92 = vunpack.c.h.b16 %v86
    %v93 = vpack.c.b16 %v89, %v89
    %v94 = vpack.c.b16 %v90, %v90
    %v95 = vpack.c.b16 %v91, %v91
    %v96 = vpack.c.b16 %v92, %v92
    %vm97 = vsmask.f32 256
    %vm98 = vsmask.f32 4368
    %vm99 = vmor %vm97, %vm98
    %v101 = vshrl.u32 %v93, 16
    %v103 = vrot.slane %v101, 7
    %v104 = vshll.u32 %v93, 16
    %v106 = vor.u32 %v103, %v104
    %v107 = vrot.slane %v103, 4
    %v109 = vshrl.u32 %v94, 16
    %v111 = vrot.slane %v109, 7
    %v112 = vshll.u32 %v94, 16
    %v114 = vor.u32 %v111, %v112
    %v115 = vsel %vm99, %v107, %v114
    %v116 = vrot.slane %v111, 4
    %v118 = vshrl.u32 %v95, 16
    %v120 = vrot.slane %v118, 7
    %v121 = vshll.u32 %v95, 16
    %v123 = vor.u32 %v120, %v121
    %v124 = vrot.slane %v120, 4
    %v126 = vshrl.u32 %v96, 16
    %v128 = vrot.slane %v126, 7
    %v129 = vshll.u32 %v96, 16
    %v131 = vor.u32 %v128, %v129
    %v132 = vsel %vm99, %v124, %v131
    %v133 = vrot.slane %v128, 4
    %vm140 = vcmask 1043456
    %vm141 = vsmask.f32 7938
    %vm142 = vmand %vm140, %vm141
    %v143 = vld [vmem:[#allocation2] sm:$0xf]
    %v144 = vsel %vm142, %v106, %v143
    %145 = vst [vmem:[#allocation2] sm:$0xf] %v144
    %146 = vst [vmem:[#allocation2 + $0x4] sm:$0xf] %v115
    %vm147 = vcmask 1040384
    %vm148 = vmand %vm147, %vm97
    %v149 = vld [vmem:[#allocation2 + $0x8] sm:$0x1]
    %v150 = vsel %vm148, %v116, %v149
    %151 = vst [vmem:[#allocation2 + $0x8] sm:$0x1] %v150
    %v152 = vld [vmem:[#allocation2 + $0xc] sm:$0xf]
    %v153 = vsel %vm142, %v123, %v152
    %154 = vst [vmem:[#allocation2 + $0xc] sm:$0xf] %v153
    %155 = vst [vmem:[#allocation2 + $0x10] sm:$0xf] %v132
    %v156 = vld [vmem:[#allocation2 + $0x14] sm:$0x1]
    %v157 = vsel %vm148, %v133, %v156
    %158 = vst [vmem:[#allocation2 + $0x14] sm:$0x1] %v157
    %v159 = vld [vmem:[#allocation2] sm:$0xf]
    %v160 = vld [vmem:[#allocation2 + $0x4] sm:$0xf]
    %v161 = vld [vmem:[#allocation2 + $0xc] sm:$0xf]
    %v162 = vld [vmem:[#allocation2 + $0x10] sm:$0xf]
    %v163 = vld [vmem:[#allocation6] sm:$0xf]
    %v164 = vld [vmem:[#allocation6 + $0x4] sm:$0xf]
    %v165 = vld [vmem:[#allocation6 + $0x8] sm:$0xf]
    %v166 = vld [vmem:[#allocation6 + $0xc] sm:$0xf]
    %v167 = vld [vmem:[#allocation6 + $0x10] sm:$0xf]
    %v168 = vld [vmem:[#allocation6 + $0x14] sm:$0xf]
    %v169 = vld [vmem:[#allocation6 + $0x18] sm:$0xf]
    %v170 = vld [vmem:[#allocation6 + $0x1c] sm:$0xf]
    %v171 = vld [vmem:[#allocation6 + $0x20] sm:$0xf]
    %v172 = vld [vmem:[#allocation6 + $0x24] sm:$0xf]
    %v173 = vld [vmem:[#allocation6 + $0x28] sm:$0xf]
    %v174 = vld [vmem:[#allocation6 + $0x2c] sm:$0xf]
    %v175 = vld [vmem:[#allocation6 + $0x30] sm:$0xf]
    %v176 = vld [vmem:[#allocation6 + $0x34] sm:$0xf]
    %v177 = vld [vmem:[#allocation6 + $0x38] sm:$0xf]
    %v178 = vld [vmem:[#allocation6 + $0x3c] sm:$0xf]
    %v179 = vld [vmem:[#allocation2 + $0x8] sm:$0x1]
    %v180 = vld [vmem:[#allocation2 + $0x14] sm:$0x1]
    %vm181 = vsmask.f32 3328
    %vm182 = vsmask.f32 7440
    %vm183 = vmor %vm181, %vm182
    %v185 = vshrl.u32 %v159, 16
    %v187 = vrot.slane %v185, 4
    %v188 = vshll.u32 %v159, 16
    %v190 = vrot.slane %v188, 5
    %v191 = vor.u32 %v187, %v190
    %v192 = vrot.slane %v191, 4
    %v194 = vshll.u32 %v160, 16
    %v196 = vrot.slane %v194, 5
    %v197 = vsel %vm183, %v192, %v196
    %v198 = vshrl.u32 %v160, 16
    %v200 = vrot.slane %v198, 4
    %v201 = vor.u32 %v200, %v196
    %v202 = vrot.slane %v201, 4
    %v204 = vshll.u32 %v179, 16
    %v206 = vrot.slane %v204, 5
    %v207 = vsel %vm183, %v202, %v206
    %v209 = vshrl.u32 %v161, 16
    %v211 = vrot.slane %v209, 4
    %v212 = vshll.u32 %v161, 16
    %v214 = vrot.slane %v212, 5
    %v215 = vor.u32 %v211, %v214
    %v216 = vrot.slane %v215, 4
    %v218 = vshll.u32 %v162, 16
    %v220 = vrot.slane %v218, 5
    %v221 = vsel %vm183, %v216, %v220
    %v222 = vshrl.u32 %v162, 16
    %v224 = vrot.slane %v222, 4
    %v225 = vor.u32 %v224, %v220
    %v226 = vrot.slane %v225, 4
    %v228 = vshll.u32 %v180, 16
    %v230 = vrot.slane %v228, 5
    %v231 = vsel %vm183, %v226, %v230
    %s232 = scalar_lea.vmem [#allocation6], 64
    %v233 = vld [vmem:[%s232] sm:$0xf]
    %v234 = vld [vmem:[%s232 + $0x4] sm:$0xf]
    %v235 = vld [vmem:[%s232 + $0x8] sm:$0xf]
    %v236 = vld [vmem:[%s232 + $0xc] sm:$0xf]
    %v237 = vld [vmem:[%s232 + $0x10] sm:$0xf]
    %v238 = vld [vmem:[%s232 + $0x14] sm:$0xf]
    %v239 = vld [vmem:[%s232 + $0x18] sm:$0xf]
    %v240 = vld [vmem:[%s232 + $0x1c] sm:$0xf]
    %v241 = vld [vmem:[%s232 + $0x20] sm:$0xf]
    %v242 = vld [vmem:[%s232 + $0x24] sm:$0xf]
    %v243 = vld [vmem:[%s232 + $0x28] sm:$0xf]
    %v244 = vld [vmem:[%s232 + $0x2c] sm:$0xf]
    %v245 = vld [vmem:[%s232 + $0x30] sm:$0xf]
    %v246 = vld [vmem:[%s232 + $0x34] sm:$0xf]
    %v247 = vld [vmem:[%s232 + $0x38] sm:$0xf]
    %v248 = vld [vmem:[%s232 + $0x3c] sm:$0xf]
    %v249 = vunpack.c.l.b16 %v197
    %v250 = vunpack.c.l.b16 %v207
    %v251 = vunpack.c.l.b16 %v221
    %v252 = vunpack.c.l.b16 %v231
    %v253 = vpack.c.b16 %v250, %v249
    %v254 = vpack.c.b16 %v252, %v251
    %v273 = vunpack.c.l.b16 %v233
    %v274 = vunpack.c.l.b16 %v234
    %v275 = vunpack.c.l.b16 %v235
    %v276 = vunpack.c.l.b16 %v236
    %v277 = vunpack.c.l.b16 %v237
    %v278 = vunpack.c.l.b16 %v238
    %v279 = vunpack.c.l.b16 %v239
    %v280 = vunpack.c.l.b16 %v240
    %v281 = vunpack.c.l.b16 %v241
    %v282 = vunpack.c.l.b16 %v242
    %v283 = vunpack.c.l.b16 %v243
    %v284 = vunpack.c.l.b16 %v244
    %v285 = vunpack.c.l.b16 %v245
    %v286 = vunpack.c.l.b16 %v246
    %v287 = vunpack.c.l.b16 %v247
    %v288 = vunpack.c.l.b16 %v248
    %v289 = vpack.c.b16 %v274, %v273
    %v290 = vpack.c.b16 %v276, %v275
    %v291 = vpack.c.b16 %v278, %v277
    %v292 = vpack.c.b16 %v280, %v279
    %v293 = vpack.c.b16 %v282, %v281
    %v294 = vpack.c.b16 %v284, %v283
    %v295 = vpack.c.b16 %v286, %v285
    %v296 = vpack.c.b16 %v288, %v287
    %305 = vmatprep.subr.bf16.mxu0 0
    %306 = vmatpush1.bf16.msra.mxu0 %v289
    %307 = vmatprep.subr.bf16.mxu0 0
    %308 = vmatpush1.bf16.msra.mxu0 %v290
    %309 = vmatprep.subr.bf16.mxu0 0
    %310 = vmatpush1.bf16.msra.mxu0 %v291
    %311 = vmatprep.subr.bf16.mxu0 0
    %312 = vmatpush1.bf16.msra.mxu0 %v292
    %313 = vmatprep.subr.bf16.mxu0 0
    %314 = vmatpush1.bf16.msra.mxu0 %v293
    %315 = vmatprep.subr.bf16.mxu0 0
    %316 = vmatpush1.bf16.msra.mxu0 %v294
    %317 = vmatprep.subr.bf16.mxu0 0
    %318 = vmatpush1.bf16.msra.mxu0 %v295
    %319 = vmatprep.subr.bf16.mxu0 0
    %320 = vmatpush1.bf16.msra.mxu0 %v296
    %321 = vmatprep.subr.bf16.mxu0 0
    %322 = vmatpush1.bf16.msra.mxu0 0
    %323 = vmatprep.subr.bf16.mxu0 0
    %324 = vmatpush1.bf16.msra.mxu0 0
    %325 = vmatprep.subr.bf16.mxu0 0
    %326 = vmatpush1.bf16.msra.mxu0 0
    %327 = vmatprep.subr.bf16.mxu0 0
    %328 = vmatpush1.bf16.msra.mxu0 0
    %329 = vmatprep.subr.bf16.mxu0 0
    %330 = vmatpush1.bf16.msra.mxu0 0
    %331 = vmatprep.subr.bf16.mxu0 0
    %332 = vmatpush1.bf16.msra.mxu0 0
    %333 = vmatprep.subr.bf16.mxu0 0
    %334 = vmatpush1.bf16.msra.mxu0 0
    %335 = vmatprep.subr.bf16.mxu0 0
    %336 = vmatpush1.bf16.msra.mxu0 0
    %337 = vmatprep.mubr.bf16.mxu0 0
    %338 = vmatmul.mubr.bf16.gmra.mrb[0].mxu0 %v253
    %v339 = vpop.f32.mrb[0].mxu0
    %v340 = vadd.f32 0.0, %v339
    %v341 = vpop.f32.mrb[0].mxu0
    %v342 = vpop.f32.mrb[0].mxu0
    %v343 = vadd.f32 0.0, %v342
    %v344 = vpop.f32.mrb[0].mxu0
    %345 = vmatprep.mubr.bf16.mxu0 0
    %346 = vmatmul.mubr.bf16.gmra.mrb[0].mxu0 %v254
    %v347 = vpop.f32.mrb[0].mxu0
    %v348 = vadd.f32 0.0, %v347
    %v349 = vpop.f32.mrb[0].mxu0
    %v350 = vpop.f32.mrb[0].mxu0
    %v351 = vadd.f32 0.0, %v350
    %v352 = vpop.f32.mrb[0].mxu0
    %353 = vdwg.mxu0
    %v358 = vunpack.c.l.b16 %v159
    %v359 = vunpack.c.l.b16 %v160
    %v360 = vunpack.c.l.b16 %v161
    %v361 = vunpack.c.l.b16 %v162
    %v362 = vpack.c.b16 %v359, %v358
    %v363 = vpack.c.b16 %v361, %v360
    %v382 = vunpack.c.l.b16 %v163
    %v383 = vunpack.c.l.b16 %v164
    %v384 = vunpack.c.l.b16 %v165
    %v385 = vunpack.c.l.b16 %v166
    %v386 = vunpack.c.l.b16 %v167
    %v387 = vunpack.c.l.b16 %v168
    %v388 = vunpack.c.l.b16 %v169
    %v389 = vunpack.c.l.b16 %v170
    %v390 = vunpack.c.l.b16 %v171
    %v391 = vunpack.c.l.b16 %v172
    %v392 = vunpack.c.l.b16 %v173
    %v393 = vunpack.c.l.b16 %v174
    %v394 = vunpack.c.l.b16 %v175
    %v395 = vunpack.c.l.b16 %v176
    %v396 = vunpack.c.l.b16 %v177
    %v397 = vunpack.c.l.b16 %v178
    %v398 = vpack.c.b16 %v383, %v382
    %v399 = vpack.c.b16 %v385, %v384
    %v400 = vpack.c.b16 %v387, %v386
    %v401 = vpack.c.b16 %v389, %v388
    %v402 = vpack.c.b16 %v391, %v390
    %v403 = vpack.c.b16 %v393, %v392
    %v404 = vpack.c.b16 %v395, %v394
    %v405 = vpack.c.b16 %v397, %v396
    %414 = vmatprep.subr.bf16.mxu0 0
    %415 = vmatpush1.bf16.msra.mxu0 %v398
    %416 = vmatprep.subr.bf16.mxu0 0
    %417 = vmatpush1.bf16.msra.mxu0 %v399
    %418 = vmatprep.subr.bf16.mxu0 0
    %419 = vmatpush1.bf16.msra.mxu0 %v400
    %420 = vmatprep.subr.bf16.mxu0 0
    %421 = vmatpush1.bf16.msra.mxu0 %v401
    %422 = vmatprep.subr.bf16.mxu0 0
    %423 = vmatpush1.bf16.msra.mxu0 %v402
    %424 = vmatprep.subr.bf16.mxu0 0
    %425 = vmatpush1.bf16.msra.mxu0 %v403
    %426 = vmatprep.subr.bf16.mxu0 0
    %427 = vmatpush1.bf16.msra.mxu0 %v404
    %428 = vmatprep.subr.bf16.mxu0 0
    %429 = vmatpush1.bf16.msra.mxu0 %v405
    %430 = vmatprep.subr.bf16.mxu0 0
    %431 = vmatpush1.bf16.msra.mxu0 0
    %432 = vmatprep.subr.bf16.mxu0 0
    %433 = vmatpush1.bf16.msra.mxu0 0
    %434 = vmatprep.subr.bf16.mxu0 0
    %435 = vmatpush1.bf16.msra.mxu0 0
    %436 = vmatprep.subr.bf16.mxu0 0
    %437 = vmatpush1.bf16.msra.mxu0 0
    %438 = vmatprep.subr.bf16.mxu0 0
    %439 = vmatpush1.bf16.msra.mxu0 0
    %440 = vmatprep.subr.bf16.mxu0 0
    %441 = vmatpush1.bf16.msra.mxu0 0
    %442 = vmatprep.subr.bf16.mxu0 0
    %443 = vmatpush1.bf16.msra.mxu0 0
    %444 = vmatprep.subr.bf16.mxu0 0
    %445 = vmatpush1.bf16.msra.mxu0 0
    %446 = vmatprep.mubr.bf16.mxu0 0
    %447 = vmatmul.mubr.bf16.gmra.mrb[0].mxu0 %v362
    %v448 = vpop.f32.mrb[0].mxu0
    %v449 = vadd.f32 %v340, %v448
    %v450 = vpop.f32.mrb[0].mxu0
    %v451 = vpop.f32.mrb[0].mxu0
    %v452 = vadd.f32 %v343, %v451
    %v453 = vpop.f32.mrb[0].mxu0
    %454 = vmatprep.mubr.bf16.mxu0 0
    %455 = vmatmul.mubr.bf16.gmra.mrb[0].mxu0 %v363
    %v456 = vpop.f32.mrb[0].mxu0
    %v457 = vadd.f32 %v348, %v456
    %v458 = vpop.f32.mrb[0].mxu0
    %v459 = vpop.f32.mrb[0].mxu0
    %v460 = vadd.f32 %v351, %v459
    %v461 = vpop.f32.mrb[0].mxu0
    %462 = vdwg.mxu0
    %v463 = vld [vmem:[#allocation2] sm:$0xe]
    %v464 = vld [vmem:[#allocation2 + $0xc] sm:$0xe]
    %vm469 = vcmask 1042432
    %vm470 = vcmask 1046532
    %vm471 = vmor %vm469, %vm470
    %v472 = vrot.slane %v463, 5
    %v473 = vrot.slane %v472, 4
    %v474 = vrot.slane %v160, 5
    %v475 = vsel %vm471, %v473, %v474
    %v476 = vrot.slane %v474, 4
    %v477 = vrot.slane %v179, 5
    %v478 = vsel %vm471, %v476, %v477
    %v479 = vrot.slane %v464, 5
    %v480 = vrot.slane %v479, 4
    %v481 = vrot.slane %v162, 5
    %v482 = vsel %vm471, %v480, %v481
    %v483 = vrot.slane %v481, 4
    %v484 = vrot.slane %v180, 5
    %v485 = vsel %vm471, %v483, %v484
    %s486 = scalar_lea.vmem [#allocation6], 128
    %v487 = vld [vmem:[%s486] sm:$0xf]
    %v488 = vld [vmem:[%s486 + $0x4] sm:$0xf]
    %v489 = vld [vmem:[%s486 + $0x8] sm:$0xf]
    %v490 = vld [vmem:[%s486 + $0xc] sm:$0xf]
    %v491 = vld [vmem:[%s486 + $0x10] sm:$0xf]
    %v492 = vld [vmem:[%s486 + $0x14] sm:$0xf]
    %v493 = vld [vmem:[%s486 + $0x18] sm:$0xf]
    %v494 = vld [vmem:[%s486 + $0x1c] sm:$0xf]
    %v495 = vld [vmem:[%s486 + $0x20] sm:$0xf]
    %v496 = vld [vmem:[%s486 + $0x24] sm:$0xf]
    %v497 = vld [vmem:[%s486 + $0x28] sm:$0xf]
    %v498 = vld [vmem:[%s486 + $0x2c] sm:$0xf]
    %v499 = vld [vmem:[%s486 + $0x30] sm:$0xf]
    %v500 = vld [vmem:[%s486 + $0x34] sm:$0xf]
    %v501 = vld [vmem:[%s486 + $0x38] sm:$0xf]
    %v502 = vld [vmem:[%s486 + $0x3c] sm:$0xf]
    %v503 = vunpack.c.l.b16 %v475
    %v504 = vunpack.c.l.b16 %v478
    %v505 = vunpack.c.l.b16 %v482
    %v506 = vunpack.c.l.b16 %v485
    %v507 = vpack.c.b16 %v504, %v503
    %v508 = vpack.c.b16 %v506, %v505
    %v527 = vunpack.c.l.b16 %v487
    %v528 = vunpack.c.l.b16 %v488
    %v529 = vunpack.c.l.b16 %v489
    %v530 = vunpack.c.l.b16 %v490
    %v531 = vunpack.c.l.b16 %v491
    %v532 = vunpack.c.l.b16 %v492
    %v533 = vunpack.c.l.b16 %v493
    %v534 = vunpack.c.l.b16 %v494
    %v535 = vunpack.c.l.b16 %v495
    %v536 = vunpack.c.l.b16 %v496
    %v537 = vunpack.c.l.b16 %v497
    %v538 = vunpack.c.l.b16 %v498
    %v539 = vunpack.c.l.b16 %v499
    %v540 = vunpack.c.l.b16 %v500
    %v541 = vunpack.c.l.b16 %v501
    %v542 = vunpack.c.l.b16 %v502
    %v543 = vpack.c.b16 %v528, %v527
    %v544 = vpack.c.b16 %v530, %v529
    %v545 = vpack.c.b16 %v532, %v531
    %v546 = vpack.c.b16 %v534, %v533
    %v547 = vpack.c.b16 %v536, %v535
    %v548 = vpack.c.b16 %v538, %v537
    %v549 = vpack.c.b16 %v540, %v539
    %v550 = vpack.c.b16 %v542, %v541
    %559 = vmatprep.subr.bf16.mxu0 0
    %560 = vmatpush1.bf16.msra.mxu0 %v543
    %561 = vmatprep.subr.bf16.mxu0 0
    %562 = vmatpush1.bf16.msra.mxu0 %v544
    %563 = vmatprep.subr.bf16.mxu0 0
    %564 = vmatpush1.bf16.msra.mxu0 %v545
    %565 = vmatprep.subr.bf16.mxu0 0
    %566 = vmatpush1.bf16.msra.mxu0 %v546
    %567 = vmatprep.subr.bf16.mxu0 0
    %568 = vmatpush1.bf16.msra.mxu0 %v547
    %569 = vmatprep.subr.bf16.mxu0 0
    %570 = vmatpush1.bf16.msra.mxu0 %v548
    %571 = vmatprep.subr.bf16.mxu0 0
    %572 = vmatpush1.bf16.msra.mxu0 %v549
    %573 = vmatprep.subr.bf16.mxu0 0
    %574 = vmatpush1.bf16.msra.mxu0 %v550
    %575 = vmatprep.subr.bf16.mxu0 0
    %576 = vmatpush1.bf16.msra.mxu0 0
    %577 = vmatprep.subr.bf16.mxu0 0
    %578 = vmatpush1.bf16.msra.mxu0 0
    %579 = vmatprep.subr.bf16.mxu0 0
    %580 = vmatpush1.bf16.msra.mxu0 0
    %581 = vmatprep.subr.bf16.mxu0 0
    %582 = vmatpush1.bf16.msra.mxu0 0
    %583 = vmatprep.subr.bf16.mxu0 0
    %584 = vmatpush1.bf16.msra.mxu0 0
    %585 = vmatprep.subr.bf16.mxu0 0
    %586 = vmatpush1.bf16.msra.mxu0 0
    %587 = vmatprep.subr.bf16.mxu0 0
    %588 = vmatpush1.bf16.msra.mxu0 0
    %589 = vmatprep.subr.bf16.mxu0 0
    %590 = vmatpush1.bf16.msra.mxu0 0
    %591 = vmatprep.mubr.bf16.mxu0 0
    %592 = vmatmul.mubr.bf16.gmra.mrb[0].mxu0 %v507
    %v593 = vpop.f32.mrb[0].mxu0
    %v594 = vadd.f32 0.0, %v593
    %v595 = vpop.f32.mrb[0].mxu0
    %v596 = vpop.f32.mrb[0].mxu0
    %v597 = vadd.f32 0.0, %v596
    %v598 = vpop.f32.mrb[0].mxu0
    %599 = vmatprep.mubr.bf16.mxu0 0
    %600 = vmatmul.mubr.bf16.gmra.mrb[0].mxu0 %v508
    %v601 = vpop.f32.mrb[0].mxu0
    %v602 = vadd.f32 0.0, %v601
    %v603 = vpop.f32.mrb[0].mxu0
    %v604 = vpop.f32.mrb[0].mxu0
    %v605 = vadd.f32 0.0, %v604
    %v606 = vpop.f32.mrb[0].mxu0
    %607 = vdwg.mxu0
    %v608 = vadd.f32 %v449, %v594
    %v609 = vadd.f32 %v452, %v597
    %v610 = vadd.f32 %v457, %v602
    %v611 = vadd.f32 %v460, %v605
    %v612 = vld [vmem:[%s3] sm:$0x1]
    %v613 = vlaneseq
    %v614 = vshrl.u32 %v613, 7
    %v615 = vsub.s32 0, %v614
    %v616 = vrot.slane %v612, %v615
    %v617 = vmul.f32 %v608, %v616
    %v618 = vmul.f32 %v609, %v616
    %v619 = vmul.f32 %v610, %v616
    %v620 = vmul.f32 %v611, %v616
    %v621 = vld [vmem:[%s3 + $0x1] sm:$0x1]
    %v622 = vlaneseq
    %v623 = vshrl.u32 %v622, 7
    %v624 = vsub.s32 0, %v623
    %v625 = vrot.slane %v621, %v624
    %v626 = vadd.f32 %v617, %v625
    %v627 = vadd.f32 %v618, %v625
    %v628 = vadd.f32 %v619, %v625
    %v629 = vadd.f32 %v620, %v625
    %v630 = vmax.f32 %v626, 0.0
    %v631 = vmax.f32 %v627, 0.0
    %v632 = vmax.f32 %v628, 0.0
    %v633 = vmax.f32 %v629, 0.0
    %v634 = vpack.c.bf16 %v631, %v630
    %v635 = vpack.c.bf16 %v633, %v632
    %v638 = vunpack.c.l.b16 %v634
    %v639 = vunpack.c.h.b16 %v634
    %v640 = vunpack.c.l.b16 %v635
    %v641 = vunpack.c.h.b16 %v635
    %v642 = vpack.c.b16 %v638, %v638
    %v643 = vpack.c.b16 %v639, %v639
    %v644 = vpack.c.b16 %v640, %v640
    %v645 = vpack.c.b16 %v641, %v641
    %v647 = vshrl.u32 %v642, 16
    %v649 = vrot.slane %v647, 7
    %v650 = vshll.u32 %v642, 16
    %v652 = vor.u32 %v649, %v650
    %v653 = vrot.slane %v649, 4
    %v655 = vshrl.u32 %v643, 16
    %v657 = vrot.slane %v655, 7
    %v658 = vshll.u32 %v643, 16
    %v660 = vor.u32 %v657, %v658
    %v661 = vsel %vm99, %v653, %v660
    %v662 = vrot.slane %v657, 4
    %v664 = vshrl.u32 %v644, 16
    %v666 = vrot.slane %v664, 7
    %v667 = vshll.u32 %v644, 16
    %v669 = vor.u32 %v666, %v667
    %v670 = vrot.slane %v666, 4
    %v672 = vshrl.u32 %v645, 16
    %v674 = vrot.slane %v672, 7
    %v675 = vshll.u32 %v645, 16
    %v677 = vor.u32 %v674, %v675
    %v678 = vsel %vm99, %v670, %v677
    %v679 = vrot.slane %v674, 4
    %v686 = vsel %vm142, %v652, %v159
    %687 = vst [vmem:[#allocation2] sm:$0xf] %v686
    %688 = vst [vmem:[#allocation2 + $0x4] sm:$0xf] %v661
    %v689 = vld [vmem:[#allocation2 + $0x8] sm:$0x1]
    %v690 = vsel %vm148, %v662, %v689
    %691 = vst [vmem:[#allocation2 + $0x8] sm:$0x1] %v690
    %v692 = vld [vmem:[#allocation2 + $0xc] sm:$0xf]
    %v693 = vsel %vm142, %v669, %v692
    %694 = vst [vmem:[#allocation2 + $0xc] sm:$0xf] %v693
    %695 = vst [vmem:[#allocation2 + $0x10] sm:$0xf] %v678
    %v696 = vld [vmem:[#allocation2 + $0x14] sm:$0x1]
    %v697 = vsel %vm148, %v679, %v696
    %698 = vst [vmem:[#allocation2 + $0x14] sm:$0x1] %v697
    %v699 = vld [vmem:[#allocation2] sm:$0xf]
    %v700 = vld [vmem:[#allocation2 + $0x4] sm:$0xf]
    %v701 = vld [vmem:[#allocation2 + $0xc] sm:$0xf]
    %v702 = vld [vmem:[#allocation2 + $0x10] sm:$0xf]
    %v703 = vld [vmem:[#allocation8] sm:$0xf]
    %v704 = vld [vmem:[#allocation8 + $0x4] sm:$0xf]
    %v705 = vld [vmem:[#allocation8 + $0x8] sm:$0xf]
    %v706 = vld [vmem:[#allocation8 + $0xc] sm:$0xf]
    %v707 = vld [vmem:[#allocation8 + $0x10] sm:$0xf]
    %v708 = vld [vmem:[#allocation8 + $0x14] sm:$0xf]
    %v709 = vld [vmem:[#allocation8 + $0x18] sm:$0xf]
    %v710 = vld [vmem:[#allocation8 + $0x1c] sm:$0xf]
    %v711 = vld [vmem:[#allocation8 + $0x20] sm:$0xf]
    %v712 = vld [vmem:[#allocation8 + $0x24] sm:$0xf]
    %v713 = vld [vmem:[#allocation8 + $0x28] sm:$0xf]
    %v714 = vld [vmem:[#allocation8 + $0x2c] sm:$0xf]
    %v715 = vld [vmem:[#allocation8 + $0x30] sm:$0xf]
    %v716 = vld [vmem:[#allocation8 + $0x34] sm:$0xf]
    %v717 = vld [vmem:[#allocation8 + $0x38] sm:$0xf]
    %v718 = vld [vmem:[#allocation8 + $0x3c] sm:$0xf]
    %v719 = vld [vmem:[#allocation2 + $0x8] sm:$0x1]
    %v720 = vld [vmem:[#allocation2 + $0x14] sm:$0x1]
    %v722 = vshrl.u32 %v699, 16
    %v724 = vrot.slane %v722, 4
    %v725 = vshll.u32 %v699, 16
    %v727 = vrot.slane %v725, 5
    %v728 = vor.u32 %v724, %v727
    %v729 = vrot.slane %v728, 4
    %v731 = vshll.u32 %v700, 16
    %v733 = vrot.slane %v731, 5
    %v734 = vsel %vm183, %v729, %v733
    %v735 = vshrl.u32 %v700, 16
    %v737 = vrot.slane %v735, 4
    %v738 = vor.u32 %v737, %v733
    %v739 = vrot.slane %v738, 4
    %v741 = vshll.u32 %v719, 16
    %v743 = vrot.slane %v741, 5
    %v744 = vsel %vm183, %v739, %v743
    %v746 = vshrl.u32 %v701, 16
    %v748 = vrot.slane %v746, 4
    %v749 = vshll.u32 %v701, 16
    %v751 = vrot.slane %v749, 5
    %v752 = vor.u32 %v748, %v751
    %v753 = vrot.slane %v752, 4
    %v755 = vshll.u32 %v702, 16
    %v757 = vrot.slane %v755, 5
    %v758 = vsel %vm183, %v753, %v757
    %v759 = vshrl.u32 %v702, 16
    %v761 = vrot.slane %v759, 4
    %v762 = vor.u32 %v761, %v757
    %v763 = vrot.slane %v762, 4
    %v765 = vshll.u32 %v720, 16
    %v767 = vrot.slane %v765, 5
    %v768 = vsel %vm183, %v763, %v767
    %s769 = scalar_lea.vmem [#allocation8], 64
    %v770 = vld [vmem:[%s769] sm:$0xf]
    %v771 = vld [vmem:[%s769 + $0x4] sm:$0xf]
    %v772 = vld [vmem:[%s769 + $0x8] sm:$0xf]
    %v773 = vld [vmem:[%s769 + $0xc] sm:$0xf]
    %v774 = vld [vmem:[%s769 + $0x10] sm:$0xf]
    %v775 = vld [vmem:[%s769 + $0x14] sm:$0xf]
    %v776 = vld [vmem:[%s769 + $0x18] sm:$0xf]
    %v777 = vld [vmem:[%s769 + $0x1c] sm:$0xf]
    %v778 = vld [vmem:[%s769 + $0x20] sm:$0xf]
    %v779 = vld [vmem:[%s769 + $0x24] sm:$0xf]
    %v780 = vld [vmem:[%s769 + $0x28] sm:$0xf]
    %v781 = vld [vmem:[%s769 + $0x2c] sm:$0xf]
    %v782 = vld [vmem:[%s769 + $0x30] sm:$0xf]
    %v783 = vld [vmem:[%s769 + $0x34] sm:$0xf]
    %v784 = vld [vmem:[%s769 + $0x38] sm:$0xf]
    %v785 = vld [vmem:[%s769 + $0x3c] sm:$0xf]
    %v786 = vunpack.c.l.b16 %v734
    %v787 = vunpack.c.l.b16 %v744
    %v788 = vunpack.c.l.b16 %v758
    %v789 = vunpack.c.l.b16 %v768
    %v790 = vpack.c.b16 %v787, %v786
    %v791 = vpack.c.b16 %v789, %v788
    %v810 = vunpack.c.l.b16 %v770
    %v811 = vunpack.c.l.b16 %v771
    %v812 = vunpack.c.l.b16 %v772
    %v813 = vunpack.c.l.b16 %v773
    %v814 = vunpack.c.l.b16 %v774
    %v815 = vunpack.c.l.b16 %v775
    %v816 = vunpack.c.l.b16 %v776
    %v817 = vunpack.c.l.b16 %v777
    %v818 = vunpack.c.l.b16 %v778
    %v819 = vunpack.c.l.b16 %v779
    %v820 = vunpack.c.l.b16 %v780
    %v821 = vunpack.c.l.b16 %v781
    %v822 = vunpack.c.l.b16 %v782
    %v823 = vunpack.c.l.b16 %v783
    %v824 = vunpack.c.l.b16 %v784
    %v825 = vunpack.c.l.b16 %v785
    %v826 = vpack.c.b16 %v811, %v810
    %v827 = vpack.c.b16 %v813, %v812
    %v828 = vpack.c.b16 %v815, %v814
    %v829 = vpack.c.b16 %v817, %v816
    %v830 = vpack.c.b16 %v819, %v818
    %v831 = vpack.c.b16 %v821, %v820
    %v832 = vpack.c.b16 %v823, %v822
    %v833 = vpack.c.b16 %v825, %v824
    %842 = vmatprep.subr.bf16.mxu0 0
    %843 = vmatpush1.bf16.msra.mxu0 %v826
    %844 = vmatprep.subr.bf16.mxu0 0
    %845 = vmatpush1.bf16.msra.mxu0 %v827
    %846 = vmatprep.subr.bf16.mxu0 0
    %847 = vmatpush1.bf16.msra.mxu0 %v828
    %848 = vmatprep.subr.bf16.mxu0 0
    %849 = vmatpush1.bf16.msra.mxu0 %v829
    %850 = vmatprep.subr.bf16.mxu0 0
    %851 = vmatpush1.bf16.msra.mxu0 %v830
    %852 = vmatprep.subr.bf16.mxu0 0
    %853 = vmatpush1.bf16.msra.mxu0 %v831
    %854 = vmatprep.subr.bf16.mxu0 0
    %855 = vmatpush1.bf16.msra.mxu0 %v832
    %856 = vmatprep.subr.bf16.mxu0 0
    %857 = vmatpush1.bf16.msra.mxu0 %v833
    %858 = vmatprep.subr.bf16.mxu0 0
    %859 = vmatpush1.bf16.msra.mxu0 0
    %860 = vmatprep.subr.bf16.mxu0 0
    %861 = vmatpush1.bf16.msra.mxu0 0
    %862 = vmatprep.subr.bf16.mxu0 0
    %863 = vmatpush1.bf16.msra.mxu0 0
    %864 = vmatprep.subr.bf16.mxu0 0
    %865 = vmatpush1.bf16.msra.mxu0 0
    %866 = vmatprep.subr.bf16.mxu0 0
    %867 = vmatpush1.bf16.msra.mxu0 0
    %868 = vmatprep.subr.bf16.mxu0 0
    %869 = vmatpush1.bf16.msra.mxu0 0
    %870 = vmatprep.subr.bf16.mxu0 0
    %871 = vmatpush1.bf16.msra.mxu0 0
    %872 = vmatprep.subr.bf16.mxu0 0
    %873 = vmatpush1.bf16.msra.mxu0 0
    %874 = vmatprep.mubr.bf16.mxu0 0
    %875 = vmatmul.mubr.bf16.gmra.mrb[0].mxu0 %v790
    %v876 = vpop.f32.mrb[0].mxu0
    %v877 = vadd.f32 0.0, %v876
    %v878 = vpop.f32.mrb[0].mxu0
    %v879 = vpop.f32.mrb[0].mxu0
    %v880 = vadd.f32 0.0, %v879
    %v881 = vpop.f32.mrb[0].mxu0
    %882 = vmatprep.mubr.bf16.mxu0 0
    %883 = vmatmul.mubr.bf16.gmra.mrb[0].mxu0 %v791
    %v884 = vpop.f32.mrb[0].mxu0
    %v885 = vadd.f32 0.0, %v884
    %v886 = vpop.f32.mrb[0].mxu0
    %v887 = vpop.f32.mrb[0].mxu0
    %v888 = vadd.f32 0.0, %v887
    %v889 = vpop.f32.mrb[0].mxu0
    %890 = vdwg.mxu0
    %v895 = vunpack.c.l.b16 %v699
    %v896 = vunpack.c.l.b16 %v700
    %v897 = vunpack.c.l.b16 %v701
    %v898 = vunpack.c.l.b16 %v702
    %v899 = vpack.c.b16 %v896, %v895
    %v900 = vpack.c.b16 %v898, %v897
    %v919 = vunpack.c.l.b16 %v703
    %v920 = vunpack.c.l.b16 %v704
    %v921 = vunpack.c.l.b16 %v705
    %v922 = vunpack.c.l.b16 %v706
    %v923 = vunpack.c.l.b16 %v707
    %v924 = vunpack.c.l.b16 %v708
    %v925 = vunpack.c.l.b16 %v709
    %v926 = vunpack.c.l.b16 %v710
    %v927 = vunpack.c.l.b16 %v711
    %v928 = vunpack.c.l.b16 %v712
    %v929 = vunpack.c.l.b16 %v713
    %v930 = vunpack.c.l.b16 %v714
    %v931 = vunpack.c.l.b16 %v715
    %v932 = vunpack.c.l.b16 %v716
    %v933 = vunpack.c.l.b16 %v717
    %v934 = vunpack.c.l.b16 %v718
    %v935 = vpack.c.b16 %v920, %v919
    %v936 = vpack.c.b16 %v922, %v921
    %v937 = vpack.c.b16 %v924, %v923
    %v938 = vpack.c.b16 %v926, %v925
    %v939 = vpack.c.b16 %v928, %v927
    %v940 = vpack.c.b16 %v930, %v929
    %v941 = vpack.c.b16 %v932, %v931
    %v942 = vpack.c.b16 %v934, %v933
    %951 = vmatprep.subr.bf16.mxu0 0
    %952 = vmatpush1.bf16.msra.mxu0 %v935
    %953 = vmatprep.subr.bf16.mxu0 0
    %954 = vmatpush1.bf16.msra.mxu0 %v936
    %955 = vmatprep.subr.bf16.mxu0 0
    %956 = vmatpush1.bf16.msra.mxu0 %v937
    %957 = vmatprep.subr.bf16.mxu0 0
    %958 = vmatpush1.bf16.msra.mxu0 %v938
    %959 = vmatprep.subr.bf16.mxu0 0
    %960 = vmatpush1.bf16.msra.mxu0 %v939
    %961 = vmatprep.subr.bf16.mxu0 0
    %962 = vmatpush1.bf16.msra.mxu0 %v940
    %963 = vmatprep.subr.bf16.mxu0 0
    %964 = vmatpush1.bf16.msra.mxu0 %v941
    %965 = vmatprep.subr.bf16.mxu0 0
    %966 = vmatpush1.bf16.msra.mxu0 %v942
    %967 = vmatprep.subr.bf16.mxu0 0
    %968 = vmatpush1.bf16.msra.mxu0 0
    %969 = vmatprep.subr.bf16.mxu0 0
    %970 = vmatpush1.bf16.msra.mxu0 0
    %971 = vmatprep.subr.bf16.mxu0 0
    %972 = vmatpush1.bf16.msra.mxu0 0
    %973 = vmatprep.subr.bf16.mxu0 0
    %974 = vmatpush1.bf16.msra.mxu0 0
    %975 = vmatprep.subr.bf16.mxu0 0
    %976 = vmatpush1.bf16.msra.mxu0 0
    %977 = vmatprep.subr.bf16.mxu0 0
    %978 = vmatpush1.bf16.msra.mxu0 0
    %979 = vmatprep.subr.bf16.mxu0 0
    %980 = vmatpush1.bf16.msra.mxu0 0
    %981 = vmatprep.subr.bf16.mxu0 0
    %982 = vmatpush1.bf16.msra.mxu0 0
    %983 = vmatprep.mubr.bf16.mxu0 0
    %984 = vmatmul.mubr.bf16.gmra.mrb[0].mxu0 %v899
    %v985 = vpop.f32.mrb[0].mxu0
    %v986 = vadd.f32 %v877, %v985
    %v987 = vpop.f32.mrb[0].mxu0
    %v988 = vpop.f32.mrb[0].mxu0
    %v989 = vadd.f32 %v880, %v988
    %v990 = vpop.f32.mrb[0].mxu0
    %991 = vmatprep.mubr.bf16.mxu0 0
    %992 = vmatmul.mubr.bf16.gmra.mrb[0].mxu0 %v900
    %v993 = vpop.f32.mrb[0].mxu0
    %v994 = vadd.f32 %v885, %v993
    %v995 = vpop.f32.mrb[0].mxu0
    %v996 = vpop.f32.mrb[0].mxu0
    %v997 = vadd.f32 %v888, %v996
    %v998 = vpop.f32.mrb[0].mxu0
    %999 = vdwg.mxu0
    %v1000 = vld [vmem:[#allocation2] sm:$0xe]
    %v1001 = vld [vmem:[#allocation2 + $0xc] sm:$0xe]
    %v1006 = vrot.slane %v1000, 5
    %v1007 = vrot.slane %v1006, 4
    %v1008 = vrot.slane %v700, 5
    %v1009 = vsel %vm471, %v1007, %v1008
    %v1010 = vrot.slane %v1008, 4
    %v1011 = vrot.slane %v719, 5
    %v1012 = vsel %vm471, %v1010, %v1011
    %v1013 = vrot.slane %v1001, 5
    %v1014 = vrot.slane %v1013, 4
    %v1015 = vrot.slane %v702, 5
    %v1016 = vsel %vm471, %v1014, %v1015
    %v1017 = vrot.slane %v1015, 4
    %v1018 = vrot.slane %v720, 5
    %v1019 = vsel %vm471, %v1017, %v1018
    %s1020 = scalar_lea.vmem [#allocation8], 128
    %v1021 = vld [vmem:[%s1020] sm:$0xf]
    %v1022 = vld [vmem:[%s1020 + $0x4] sm:$0xf]
    %v1023 = vld [vmem:[%s1020 + $0x8] sm:$0xf]
    %v1024 = vld [vmem:[%s1020 + $0xc] sm:$0xf]
    %v1025 = vld [vmem:[%s1020 + $0x10] sm:$0xf]
    %v1026 = vld [vmem:[%s1020 + $0x14] sm:$0xf]
    %v1027 = vld [vmem:[%s1020 + $0x18] sm:$0xf]
    %v1028 = vld [vmem:[%s1020 + $0x1c] sm:$0xf]
    %v1029 = vld [vmem:[%s1020 + $0x20] sm:$0xf]
    %v1030 = vld [vmem:[%s1020 + $0x24] sm:$0xf]
    %v1031 = vld [vmem:[%s1020 + $0x28] sm:$0xf]
    %v1032 = vld [vmem:[%s1020 + $0x2c] sm:$0xf]
    %v1033 = vld [vmem:[%s1020 + $0x30] sm:$0xf]
    %v1034 = vld [vmem:[%s1020 + $0x34] sm:$0xf]
    %v1035 = vld [vmem:[%s1020 + $0x38] sm:$0xf]
    %v1036 = vld [vmem:[%s1020 + $0x3c] sm:$0xf]
    %v1037 = vunpack.c.l.b16 %v1009
    %v1038 = vunpack.c.l.b16 %v1012
    %v1039 = vunpack.c.l.b16 %v1016
    %v1040 = vunpack.c.l.b16 %v1019
    %v1041 = vpack.c.b16 %v1038, %v1037
    %v1042 = vpack.c.b16 %v1040, %v1039
    %v1061 = vunpack.c.l.b16 %v1021
    %v1062 = vunpack.c.l.b16 %v1022
    %v1063 = vunpack.c.l.b16 %v1023
    %v1064 = vunpack.c.l.b16 %v1024
    %v1065 = vunpack.c.l.b16 %v1025
    %v1066 = vunpack.c.l.b16 %v1026
    %v1067 = vunpack.c.l.b16 %v1027
    %v1068 = vunpack.c.l.b16 %v1028
    %v1069 = vunpack.c.l.b16 %v1029
    %v1070 = vunpack.c.l.b16 %v1030
    %v1071 = vunpack.c.l.b16 %v1031
    %v1072 = vunpack.c.l.b16 %v1032
    %v1073 = vunpack.c.l.b16 %v1033
    %v1074 = vunpack.c.l.b16 %v1034
    %v1075 = vunpack.c.l.b16 %v1035
    %v1076 = vunpack.c.l.b16 %v1036
    %v1077 = vpack.c.b16 %v1062, %v1061
    %v1078 = vpack.c.b16 %v1064, %v1063
    %v1079 = vpack.c.b16 %v1066, %v1065
    %v1080 = vpack.c.b16 %v1068, %v1067
    %v1081 = vpack.c.b16 %v1070, %v1069
    %v1082 = vpack.c.b16 %v1072, %v1071
    %v1083 = vpack.c.b16 %v1074, %v1073
    %v1084 = vpack.c.b16 %v1076, %v1075
    %1093 = vmatprep.subr.bf16.mxu0 0
    %1094 = vmatpush1.bf16.msra.mxu0 %v1077
    %1095 = vmatprep.subr.bf16.mxu0 0
    %1096 = vmatpush1.bf16.msra.mxu0 %v1078
    %1097 = vmatprep.subr.bf16.mxu0 0
    %1098 = vmatpush1.bf16.msra.mxu0 %v1079
    %1099 = vmatprep.subr.bf16.mxu0 0
    %1100 = vmatpush1.bf16.msra.mxu0 %v1080
    %1101 = vmatprep.subr.bf16.mxu0 0
    %1102 = vmatpush1.bf16.msra.mxu0 %v1081
    %1103 = vmatprep.subr.bf16.mxu0 0
    %1104 = vmatpush1.bf16.msra.mxu0 %v1082
    %1105 = vmatprep.subr.bf16.mxu0 0
    %1106 = vmatpush1.bf16.msra.mxu0 %v1083
    %1107 = vmatprep.subr.bf16.mxu0 0
    %1108 = vmatpush1.bf16.msra.mxu0 %v1084
    %1109 = vmatprep.subr.bf16.mxu0 0
    %1110 = vmatpush1.bf16.msra.mxu0 0
    %1111 = vmatprep.subr.bf16.mxu0 0
    %1112 = vmatpush1.bf16.msra.mxu0 0
    %1113 = vmatprep.subr.bf16.mxu0 0
    %1114 = vmatpush1.bf16.msra.mxu0 0
    %1115 = vmatprep.subr.bf16.mxu0 0
    %1116 = vmatpush1.bf16.msra.mxu0 0
    %1117 = vmatprep.subr.bf16.mxu0 0
    %1118 = vmatpush1.bf16.msra.mxu0 0
    %1119 = vmatprep.subr.bf16.mxu0 0
    %1120 = vmatpush1.bf16.msra.mxu0 0
    %1121 = vmatprep.subr.bf16.mxu0 0
    %1122 = vmatpush1.bf16.msra.mxu0 0
    %1123 = vmatprep.subr.bf16.mxu0 0
    %1124 = vmatpush1.bf16.msra.mxu0 0
    %1125 = vmatprep.mubr.bf16.mxu0 0
    %1126 = vmatmul.mubr.bf16.gmra.mrb[0].mxu0 %v1041
    %v1127 = vpop.f32.mrb[0].mxu0
    %v1128 = vadd.f32 0.0, %v1127
    %v1129 = vpop.f32.mrb[0].mxu0
    %v1130 = vpop.f32.mrb[0].mxu0
    %v1131 = vadd.f32 0.0, %v1130
    %v1132 = vpop.f32.mrb[0].mxu0
    %1133 = vmatprep.mubr.bf16.mxu0 0
    %1134 = vmatmul.mubr.bf16.gmra.mrb[0].mxu0 %v1042
    %v1135 = vpop.f32.mrb[0].mxu0
    %v1136 = vadd.f32 0.0, %v1135
    %v1137 = vpop.f32.mrb[0].mxu0
    %v1138 = vpop.f32.mrb[0].mxu0
    %v1139 = vadd.f32 0.0, %v1138
    %v1140 = vpop.f32.mrb[0].mxu0
    %1141 = vdwg.mxu0
    %v1142 = vadd.f32 %v986, %v1128
    %v1143 = vadd.f32 %v989, %v1131
    %v1144 = vadd.f32 %v994, %v1136
    %v1145 = vadd.f32 %v997, %v1139
    %v1146 = vld [vmem:[%s3 + $0x2] sm:$0x1]
    %v1147 = vlaneseq
    %v1148 = vshrl.u32 %v1147, 7
    %v1149 = vsub.s32 0, %v1148
    %v1150 = vrot.slane %v1146, %v1149
    %v1151 = vadd.f32 %v1142, %v1150
    %v1152 = vadd.f32 %v1143, %v1150
    %v1153 = vadd.f32 %v1144, %v1150
    %v1154 = vadd.f32 %v1145, %v1150
    %v1155 = vadd.f32 %v1151, %v81
    %v1156 = vadd.f32 %v1152, %v82
    %v1157 = vadd.f32 %v1153, %v83
    %v1158 = vadd.f32 %v1154, %v84
    %v1159 = vmax.f32 %v1155, 0.0
    %v1160 = vmax.f32 %v1156, 0.0
    %v1161 = vmax.f32 %v1157, 0.0
    %v1162 = vmax.f32 %v1158, 0.0
    %1163 = vst [vmem:[#allocation9] sm:$0xff] %v1159
    %1164 = vst [vmem:[#allocation9 + $0x8] sm:$0xff] %v1160
    %1165 = vst [vmem:[#allocation9 + $0x10] sm:$0xff] %v1161
    %1166 = vst [vmem:[#allocation9 + $0x18] sm:$0xff] %v1162
    // Predicated region
    $region34: #{tpu_custom_call.1} parent=1 // pred_check
      _
    $region35: #{tpu_custom_call.1} parent=1 // pred_check_branch
      %1168 = sbr.rel (0) target = $region37
    $region36: #{tpu_custom_call.1} parent=1 // pred_region
      %s1170 = ssub.s32 512, 512
      %1171 = vsyncadd [#allocation5], %s1170
      %s1172 = sshll.u32 [#allocation9], 4
      %s1173 = int_to_ptr.vmem [resolvable:$true] %s1172
      %1178 = dma.vmem_to_hbm [thread:$0]  %s1173, 512, %s4, [#allocation5], 128, 128, 8
    $region37: #{tpu_custom_call.1} parent=1 // pred_fallthru
      _
    // Predicated region
    $region38: #{tpu_custom_call.1} parent=1 // pred_check
      _
    $region39: #{tpu_custom_call.1} parent=1 // pred_check_branch
      %1180 = sbr.rel (0) target = $region41
    $region40: #{tpu_custom_call.1} parent=1 // pred_region
      %1181 = dma.done [#allocation5], 512
    $region41: #{tpu_custom_call.1} parent=1 // pred_fallthru
      _
    %1182 = vsyncpa [#allocation4], 1
    %1183 = vsyncpa [#allocation7], 1
    %1184 = vsyncpa [#allocation5], 1

</llo_original>
